<compile_context>
chip_gen: v6e
topology: v6e:2x2x1
jax: 0.10.0
libtpu: 0.0.40
codegen_flags: <defaults>
</compile_context>

<pallas_src>
import functools

import numpy as np
import jax
import jax.numpy as jnp
from jax.experimental import pallas as pl
from jax.experimental.pallas import tpu as pltpu


# ---------------------------------------------------------------------------
# Parameter-slab layout (computed from static sizes; used by packer and kernel)
# ---------------------------------------------------------------------------
def _round_up(x, m):
    return (x + m - 1) // m * m


def slab_layout(c, act_dim, h):
    """Row offsets inside the bf16 weight slab (rows 16-aligned: bf16 sublane tile)."""
    r_adj = 0
    r_wg = _round_up(r_adj + act_dim, 16)
    r_w1x = _round_up(r_wg + c, 16)
    r_w1a = _round_up(r_w1x + c, 16)
    r_w2 = _round_up(r_w1a + act_dim, 16)
    rows = _round_up(r_w2 + h, 16)
    width = _round_up(max(h, c, act_dim), 128)
    return dict(r_adj=r_adj, r_wg=r_wg, r_w1x=r_w1x, r_w1a=r_w1a, r_w2=r_w2,
                rows=rows, width=width)


# ---------------------------------------------------------------------------
# Kernel
# ---------------------------------------------------------------------------
def gnn_critic2_kernel(x_ref, act_ref, w_ref, b_ref, q_ref, *, c, act_dim, h, lay):
    f32 = jnp.float32
    bf16 = jnp.bfloat16
    B = x_ref.shape[0]

    x = x_ref[...]                                    # (B, A, C) f32
    a = act_ref[...]                                  # (B, A)    f32

    # --- static slices into the packed parameter slabs (cheap views) ---
    adj = w_ref[lay['r_adj']:lay['r_adj'] + act_dim, 0:act_dim]   # (A, A)  bf16
    wg = w_ref[lay['r_wg']:lay['r_wg'] + c, 0:c]                  # (C, C)  bf16
    w1x = w_ref[lay['r_w1x']:lay['r_w1x'] + c, 0:h]               # (C, H)  bf16
    w1a = w_ref[lay['r_w1a']:lay['r_w1a'] + act_dim, 0:h]         # (A, H)  bf16
    w2 = w_ref[lay['r_w2']:lay['r_w2'] + h, 0:h]                  # (H, H)  bf16

    bg = b_ref[0:1, 0:c]                                          # (1, C)  f32
    b1 = b_ref[1:2, 0:h]                                          # (1, H)  f32
    b2 = b_ref[2:3, 0:h]                                          # (1, H)  f32
    w3t = b_ref[3:4, 0:h]                                         # (1, H)  f32
    b3 = b_ref[4:5, 0:1]                                          # (1, 1)  f32

    # --- GCNConv: A_hat @ (X Wg) + bg, shared (A,A) block applied per graph ---
    xb = x.astype(bf16)
    wg_b = jnp.broadcast_to(wg[None], (B, c, c))
    xw = jnp.einsum('bnc,bcd->bnd', xb, wg_b,
                    preferred_element_type=f32)                   # (B, A, C) f32
    adj_b = jnp.broadcast_to(adj[None], (B, act_dim, act_dim))
    hg = jnp.einsum('bij,bjc->bic', adj_b, xw.astype(bf16),
                    preferred_element_type=f32)                   # (B, A, C) f32
    hg = jnp.maximum(hg + bg[None], 0.0)

    # --- residual + per-graph readout: sum over the act_dim nodes of each graph ---
    pooled = jnp.sum(hg + x, axis=1)                              # (B, C) f32

    # --- cat([pooled, action]) @ W1 + b1  ==  pooled @ W1x + action @ W1a + b1 ---
    z1 = (jnp.dot(pooled.astype(bf16), w1x, preferred_element_type=f32)
          + jnp.dot(a.astype(bf16), w1a, preferred_element_type=f32)
          + b1)
    z1 = jnp.maximum(z1, 0.0)

    z2 = jnp.dot(z1.astype(bf16), w2, preferred_element_type=f32) + b2
    z2 = jnp.maximum(z2, 0.0)

    # --- lin3 (H -> 1): f32 VPU multiply + lane reduction (w3 stored transposed) ---
    q_ref[...] = jnp.sum(z2 * w3t, axis=-1, keepdims=True) + b3


# ---------------------------------------------------------------------------
# Static graph glue + parameter packing (computed ONCE, outside the step path)
# ---------------------------------------------------------------------------
def gcn_norm_adj(edge_index, num_nodes):
    """Dense symmetric-normalized adjacency with self loops for ONE graph
    (PyG GCNConv default).  Duplicate edges scatter-add; deg==0 -> 0 convention."""
    src, dst = edge_index[0], edge_index[1]
    a = jnp.zeros((num_nodes, num_nodes), jnp.float32).at[dst, src].add(1.0)
    a = a + jnp.eye(num_nodes, dtype=jnp.float32)
    deg = a.sum(axis=1)
    d_inv_sqrt = jnp.where(deg > 0, jax.lax.rsqrt(jnp.maximum(deg, 1e-12)), 0.0)
    return d_inv_sqrt[:, None] * a * d_inv_sqrt[None, :]


def init_params(key, in_channels, hidden_size, act_dim):
    ks = jax.random.split(key, 8)
    s = 0.1
    w1 = s * jax.random.normal(ks[2], (in_channels + act_dim, hidden_size), jnp.float32)
    return dict(
        wg=s * jax.random.normal(ks[0], (in_channels, in_channels), jnp.float32),
        bg=s * jax.random.normal(ks[1], (1, in_channels), jnp.float32),
        w1x=w1[:in_channels],            # rows multiplying the pooled features
        w1a=w1[in_channels:],            # rows multiplying the action
        b1=s * jax.random.normal(ks[3], (1, hidden_size), jnp.float32),
        w2=s * jax.random.normal(ks[4], (hidden_size, hidden_size), jnp.float32),
        b2=s * jax.random.normal(ks[5], (1, hidden_size), jnp.float32),
        w3t=s * jax.random.normal(ks[6], (1, hidden_size), jnp.float32),  # lin3 w, transposed
        b3=s * jax.random.normal(ks[7], (1, 1), jnp.float32),
    )


def pack_params(params, adj, in_channels, hidden_size, act_dim):
    """Pack weights (bf16) and biases (f32) into two pre-padded VMEM-friendly slabs."""
    c, h = in_channels, hidden_size
    lay = slab_layout(c, act_dim, h)
    bf16 = jnp.bfloat16

    w = jnp.zeros((lay['rows'], lay['width']), bf16)
    w = w.at[lay['r_adj']:lay['r_adj'] + act_dim, :act_dim].set(adj.astype(bf16))
    w = w.at[lay['r_wg']:lay['r_wg'] + c, :c].set(params['wg'].astype(bf16))
    w = w.at[lay['r_w1x']:lay['r_w1x'] + c, :h].set(params['w1x'].astype(bf16))
    w = w.at[lay['r_w1a']:lay['r_w1a'] + act_dim, :h].set(params['w1a'].astype(bf16))
    w = w.at[lay['r_w2']:lay['r_w2'] + h, :h].set(params['w2'].astype(bf16))

    b = jnp.zeros((8, lay['width']), jnp.float32)
    b = b.at[0, :c].set(params['bg'][0])
    b = b.at[1, :h].set(params['b1'][0])
    b = b.at[2, :h].set(params['b2'][0])
    b = b.at[3, :h].set(params['w3t'][0])
    b = b.at[4, 0].set(params['b3'][0, 0])
    return w, b


# ---------------------------------------------------------------------------
# Forward
# ---------------------------------------------------------------------------
@functools.partial(jax.jit, static_argnames=("act_dim", "hidden_size"))
def gnn_critic2_forward(w_slab, b_slab, state, action, *, act_dim, hidden_size):
    """GNNCritic2 forward. Returns q of shape (batch,)."""
    n, c = state.shape
    b, a = action.shape
    h = hidden_size
    assert a == act_dim and n == b * act_dim
    lay = slab_layout(c, act_dim, h)

    state3 = state.reshape(b, act_dim, c)             # graph-major -> (B, A, C), free

    flops = 2 * (b * act_dim * c * c + b * act_dim * act_dim * c
                 + b * c * h + b * act_dim * h + b * h * h + b * h)
    bytes_accessed = (state3.size * 4 + action.size * 4
                      + w_slab.size * 2 + b_slab.size * 4 + b * 4)

    vmem = pl.BlockSpec(memory_space=pltpu.MemorySpace.VMEM)
    kernel = functools.partial(gnn_critic2_kernel, c=c, act_dim=act_dim, h=h, lay=lay)

    q = pl.pallas_call(
        kernel,
        out_shape=jax.ShapeDtypeStruct((b, 1), jnp.float32),
        in_specs=[vmem] * 4,
        out_specs=vmem,
        cost_estimate=pl.CostEstimate(flops=flops, transcendentals=0,
                                      bytes_accessed=bytes_accessed),
    )(state3, action, w_slab, b_slab)

    return q[:, 0]                                    # (batch,)  -- matches .squeeze(-1)


# Pure-JAX reference (mirrors kernel precision: bf16 MXU feeds, f32 accumulation).
def gnn_critic2_reference(params, adj, state, action, act_dim):
    f32, bf16 = jnp.float32, jnp.bfloat16
    b = action.shape[0]
    c = state.shape[1]
    x3 = state.reshape(b, act_dim, c)
    xw = jnp.einsum('bnc,cd->bnd', x3.astype(bf16), params['wg'].astype(bf16),
                    preferred_element_type=f32)
    hg = jnp.einsum('ij,bjc->bic', adj.astype(bf16), xw.astype(bf16),
                    preferred_element_type=f32)
    hg = jnp.maximum(hg + params['bg'][None], 0.0)
    pooled = jnp.sum(hg + x3, axis=1)
    z1 = jnp.maximum(
        jnp.dot(pooled.astype(bf16), params['w1x'].astype(bf16), preferred_element_type=f32)
        + jnp.dot(action.astype(bf16), params['w1a'].astype(bf16), preferred_element_type=f32)
        + params['b1'], 0.0)
    z2 = jnp.maximum(
        jnp.dot(z1.astype(bf16), params['w2'].astype(bf16), preferred_element_type=f32)
        + params['b2'], 0.0)
    q = jnp.sum(z2 * params['w3t'], axis=-1, keepdims=True) + params['b3']
    return q[:, 0]


# ---------------------------------------------------------------------------
# Demo
# ---------------------------------------------------------------------------
if __name__ == "__main__":
    in_channels = 21          # hardcoded by the torch reshape(-1, act_dim, 21)
    hidden_size = 256         # module default
    act_dim = 6
    batch = 4
    n_nodes = batch * act_dim

    key = jax.random.PRNGKey(0)
    k_param, k_state, k_act = jax.random.split(key, 3)

    params = init_params(k_param, in_channels, hidden_size, act_dim)
    state = jax.random.normal(k_state, (n_nodes, in_channels), jnp.float32)
    action = jax.random.normal(k_act, (batch, act_dim), jnp.float32)

    # one bidirectional ring over the act_dim nodes of a single graph; every graph
    # in the batch shares this topology (PyG batching replicates the template graph)
    base = np.arange(act_dim)
    edge_index = jnp.asarray(
        np.stack([np.concatenate([base, (base + 1) % act_dim]),
                  np.concatenate([(base + 1) % act_dim, base])]), jnp.int32)

    # static glue + parameter packing: computed ONCE, reused every forward
    adj = gcn_norm_adj(edge_index, act_dim)                       # (act_dim, act_dim)
    w_slab, b_slab = pack_params(params, adj, in_channels, hidden_size, act_dim)
    w_slab = jax.block_until_ready(w_slab)

    q = gnn_critic2_forward(w_slab, b_slab, state, action,
                            act_dim=act_dim, hidden_size=hidden_size)
    q = jax.block_until_ready(q)
    assert q.shape == (batch,)

    q_ref = gnn_critic2_reference(params, adj, state, action, act_dim)
    np.testing.assert_allclose(np.asarray(q), np.asarray(q_ref), rtol=2e-2, atol=2e-2)

    print("KERNEL_OK")
</pallas_src>

<mosaic_0001>
module attributes {stable_mosaic.version = 11 : i64} {
  func.func @gnn_critic2_kernel(%arg0: memref<4x6x21xf32, #tpu.memory_space<vmem>>, %arg1: memref<4x6xf32, #tpu.memory_space<vmem>>, %arg2: memref<352x256xbf16, #tpu.memory_space<vmem>>, %arg3: memref<8x256xf32, #tpu.memory_space<vmem>>, %arg4: memref<4x1xf32, #tpu.memory_space<vmem>>) attributes {dimension_semantics = [], scalar_prefetch = 0 : i64, scratch_operands = 0 : i64, tpu.core_type = #tpu.core_type<tc>} {
    %c0 = arith.constant 0 : index
    %c0_0 = arith.constant 0 : index
    %c0_1 = arith.constant 0 : index
    %0 = vector.load %arg0[%c0, %c0_0, %c0_1] : memref<4x6x21xf32, #tpu.memory_space<vmem>>, vector<4x6x21xf32>
    %c0_2 = arith.constant 0 : index
    %c0_3 = arith.constant 0 : index
    %1 = vector.load %arg1[%c0_2, %c0_3] : memref<4x6xf32, #tpu.memory_space<vmem>>, vector<4x6xf32>
    %c0_4 = arith.constant 0 : index
    %c0_5 = arith.constant 0 : index
    %2 = vector.load %arg2[%c0_4, %c0_5] : memref<352x256xbf16, #tpu.memory_space<vmem>>, vector<6x6xbf16>
    %c16 = arith.constant 16 : index
    %c0_6 = arith.constant 0 : index
    %3 = vector.load %arg2[%c16, %c0_6] : memref<352x256xbf16, #tpu.memory_space<vmem>>, vector<21x21xbf16>
    %c48 = arith.constant 48 : index
    %c0_7 = arith.constant 0 : index
    %4 = vector.load %arg2[%c48, %c0_7] : memref<352x256xbf16, #tpu.memory_space<vmem>>, vector<21x256xbf16>
    %c80 = arith.constant 80 : index
    %c0_8 = arith.constant 0 : index
    %5 = vector.load %arg2[%c80, %c0_8] : memref<352x256xbf16, #tpu.memory_space<vmem>>, vector<6x256xbf16>
    %c96 = arith.constant 96 : index
    %c0_9 = arith.constant 0 : index
    %6 = vector.load %arg2[%c96, %c0_9] : memref<352x256xbf16, #tpu.memory_space<vmem>>, vector<256x256xbf16>
    %c0_10 = arith.constant 0 : index
    %c0_11 = arith.constant 0 : index
    %7 = vector.load %arg3[%c0_10, %c0_11] : memref<8x256xf32, #tpu.memory_space<vmem>>, vector<1x21xf32>
    %c1 = arith.constant 1 : index
    %c0_12 = arith.constant 0 : index
    %8 = vector.load %arg3[%c1, %c0_12] : memref<8x256xf32, #tpu.memory_space<vmem>>, vector<1x256xf32>
    %c2 = arith.constant 2 : index
    %c0_13 = arith.constant 0 : index
    %9 = vector.load %arg3[%c2, %c0_13] : memref<8x256xf32, #tpu.memory_space<vmem>>, vector<1x256xf32>
    %c3 = arith.constant 3 : index
    %c0_14 = arith.constant 0 : index
    %10 = vector.load %arg3[%c3, %c0_14] : memref<8x256xf32, #tpu.memory_space<vmem>>, vector<1x256xf32>
    %c4 = arith.constant 4 : index
    %c0_15 = arith.constant 0 : index
    %11 = vector.load %arg3[%c4, %c0_15] : memref<8x256xf32, #tpu.memory_space<vmem>>, vector<1x1xf32>
    %12 = arith.truncf %0 : vector<4x6x21xf32> to vector<4x6x21xbf16>
    %13 = vector.shape_cast %3 : vector<21x21xbf16> to vector<1x21x21xbf16>
    %14 = vector.shape_cast %13 : vector<1x21x21xbf16> to vector<1x21x21xbf16>
    %15 = vector.broadcast %14 : vector<1x21x21xbf16> to vector<4x21x21xbf16>
    "tpu.trace_start"() <{level = 10 : i32, message = "bnc,bcd->bnd"}> : () -> ()
    %cst = arith.constant dense<0.000000e+00> : vector<4x6x21xf32>
    %16 = tpu.matmul %12, %15, %cst {dimension_numbers = #tpu.dot_dimension_numbers<[2], [1], [1], [2], [0, 0, 0, 1, 1, 2], [0], [0]>} : vector<4x6x21xbf16>, vector<4x21x21xbf16>, vector<4x6x21xf32> -> vector<4x6x21xf32>
    "tpu.trace_stop"() : () -> ()
    %17 = vector.shape_cast %2 : vector<6x6xbf16> to vector<1x6x6xbf16>
    %18 = vector.shape_cast %17 : vector<1x6x6xbf16> to vector<1x6x6xbf16>
    %19 = vector.broadcast %18 : vector<1x6x6xbf16> to vector<4x6x6xbf16>
    %20 = arith.truncf %16 : vector<4x6x21xf32> to vector<4x6x21xbf16>
    "tpu.trace_start"() <{level = 10 : i32, message = "bij,bjc->bic"}> : () -> ()
    %cst_16 = arith.constant dense<0.000000e+00> : vector<4x6x21xf32>
    %21 = tpu.matmul %19, %20, %cst_16 {dimension_numbers = #tpu.dot_dimension_numbers<[2], [1], [1], [2], [0, 0, 0, 1, 1, 2], [0], [0]>} : vector<4x6x6xbf16>, vector<4x6x21xbf16>, vector<4x6x21xf32> -> vector<4x6x21xf32>
    "tpu.trace_stop"() : () -> ()
    %22 = vector.shape_cast %7 : vector<1x21xf32> to vector<1x1x21xf32>
    %23 = vector.broadcast %22 : vector<1x1x21xf32> to vector<4x6x21xf32>
    %24 = arith.addf %21, %23 : vector<4x6x21xf32>
    %cst_17 = arith.constant 0.000000e+00 : f32
    %25 = vector.broadcast %cst_17 : f32 to vector<4x6x21xf32>
    %26 = arith.maximumf %24, %25 : vector<4x6x21xf32>
    %27 = arith.addf %26, %0 : vector<4x6x21xf32>
    %cst_18 = arith.constant dense<0.000000e+00> : vector<4x21xf32>
    %28 = vector.multi_reduction <add>, %27, %cst_18 [1] : vector<4x6x21xf32> to vector<4x21xf32>
    %29 = arith.truncf %28 : vector<4x21xf32> to vector<4x21xbf16>
    %cst_19 = arith.constant dense<0.000000e+00> : vector<4x256xf32>
    %30 = tpu.matmul %29, %4, %cst_19 {dimension_numbers = #tpu.dot_dimension_numbers<[1], [0], [0], [1], [0, 0, 1, 1], [], []>} : vector<4x21xbf16>, vector<21x256xbf16>, vector<4x256xf32> -> vector<4x256xf32>
    %31 = arith.truncf %1 : vector<4x6xf32> to vector<4x6xbf16>
    %cst_20 = arith.constant dense<0.000000e+00> : vector<4x256xf32>
    %32 = tpu.matmul %31, %5, %cst_20 {dimension_numbers = #tpu.dot_dimension_numbers<[1], [0], [0], [1], [0, 0, 1, 1], [], []>} : vector<4x6xbf16>, vector<6x256xbf16>, vector<4x256xf32> -> vector<4x256xf32>
    %33 = arith.addf %30, %32 : vector<4x256xf32>
    %34 = vector.broadcast %8 : vector<1x256xf32> to vector<4x256xf32>
    %35 = arith.addf %33, %34 : vector<4x256xf32>
    %cst_21 = arith.constant 0.000000e+00 : f32
    %36 = vector.broadcast %cst_21 : f32 to vector<4x256xf32>
    %37 = arith.maximumf %35, %36 : vector<4x256xf32>
    %38 = arith.truncf %37 : vector<4x256xf32> to vector<4x256xbf16>
    %cst_22 = arith.constant dense<0.000000e+00> : vector<4x256xf32>
    %39 = tpu.matmul %38, %6, %cst_22 {dimension_numbers = #tpu.dot_dimension_numbers<[1], [0], [0], [1], [0, 0, 1, 1], [], []>} : vector<4x256xbf16>, vector<256x256xbf16>, vector<4x256xf32> -> vector<4x256xf32>
    %40 = vector.broadcast %9 : vector<1x256xf32> to vector<4x256xf32>
    %41 = arith.addf %39, %40 : vector<4x256xf32>
    %cst_23 = arith.constant 0.000000e+00 : f32
    %42 = vector.broadcast %cst_23 : f32 to vector<4x256xf32>
    %43 = arith.maximumf %41, %42 : vector<4x256xf32>
    %44 = vector.broadcast %10 : vector<1x256xf32> to vector<4x256xf32>
    %45 = arith.mulf %43, %44 : vector<4x256xf32>
    %cst_24 = arith.constant dense<0.000000e+00> : vector<4xf32>
    %46 = vector.multi_reduction <add>, %45, %cst_24 [1] : vector<4x256xf32> to vector<4xf32>
    %47 = vector.shape_cast %46 : vector<4xf32> to vector<4x1xf32>
    %48 = vector.broadcast %11 : vector<1x1xf32> to vector<4x1xf32>
    %49 = arith.addf %47, %48 : vector<4x1xf32>
    %c0_25 = arith.constant 0 : index
    %c0_26 = arith.constant 0 : index
    %50 = vector.load %arg4[%c0_25, %c0_26] : memref<4x1xf32, #tpu.memory_space<vmem>>, vector<4x1xf32>
    tpu.vector_store %arg4[%c0_25, %c0_26], %49 {strides = array<i32>} : memref<4x1xf32, #tpu.memory_space<vmem>>, vector<4x1xf32>,
    return
  }
}

</mosaic_0001>

<llo_original>
// kernel: gnn_critic2_forward.1
$region0: #{gnn_critic2_forward.1}
  #allocation0 [shape = 'u32[]', space=smem, size = 0x4, offset = 0x4, fixed_abs, tag = 'smem constant byte address 0x4 - core index']
  #allocation1 [shape = 'u32[144,128]{1,0:T(1,128)}', space=vmem, size = 0x12000, scoped, tag = 'internal scratch']
  %s0 = inlined_call_operand.vmem [shape: f32[4,6,21], index: 0, kind: input, shape index: {}]
  %s1 = inlined_call_operand.vmem [shape: f32[4,6], index: 1, kind: input, shape index: {}]
  %s2 = inlined_call_operand.hbm [shape: bf16[352,256], index: 2, kind: input, shape index: {}]
  %s3 = inlined_call_operand.vmem [shape: f32[8,256], index: 3, kind: input, shape index: {}]
  %s4 = inlined_call_operand.vmem [shape: f32[4,1], index: 4, kind: output, shape index: {}]
  %s5 = sld [smem:[#allocation0]]
  $region30: #{gnn_critic2_forward.1} parent=0
    _
  %s7 = ssub.s32 1, %s5
  %s8 = scalar_select 0, %s7, %s5
  $region1: #{gnn_critic2_forward.1} parent=0
    #allocation2 [shape = 'u8[180224]{0}', space=vmem, size = 0x2c000, scoped, tag = 'input window, operand 2, single buffered']
    #allocation3 [shape = 's32[1]{0}', space=sflag, size = 0x4, scoped, tag = 'scoped memory for gnn_critic2_forward.1']
    %9 = vsyncpa [#allocation3], 0
    // Predicated region
    $region2: #{gnn_critic2_forward.1} parent=1 // pred_check
      _
    $region3: #{gnn_critic2_forward.1} parent=1 // pred_check_branch
      %11 = sbr.rel (0) target = $region5
    $region4: #{gnn_critic2_forward.1} parent=1 // pred_region
      _
    $region5: #{gnn_critic2_forward.1} parent=1 // pred_fallthru
      _
    // Predicated region
    $region6: #{gnn_critic2_forward.1} parent=1 // pred_check
      _
    $region7: #{gnn_critic2_forward.1} parent=1 // pred_check_branch
      %13 = sbr.rel (0) target = $region9
    $region8: #{gnn_critic2_forward.1} parent=1 // pred_region
      _
    $region9: #{gnn_critic2_forward.1} parent=1 // pred_fallthru
      _
    // Predicated region
    $region10: #{gnn_critic2_forward.1} parent=1 // pred_check
      _
    $region11: #{gnn_critic2_forward.1} parent=1 // pred_check_branch
      %15 = sbr.rel (0) target = $region13
    $region12: #{gnn_critic2_forward.1} parent=1 // pred_region
      %s17 = ssub.s32 5632, 5632
      %18 = vsyncadd [#allocation3], %s17
      %s19 = sshll.u32 [#allocation2], 4
      %s20 = int_to_ptr.vmem [resolvable:$true] %s19
      %25 = dma.hbm_to_vmem [thread:$0]  %s2, 5632, %s20, [#allocation3], 128, 128, 8
    $region13: #{gnn_critic2_forward.1} parent=1 // pred_fallthru
      _
    // Predicated region
    $region14: #{gnn_critic2_forward.1} parent=1 // pred_check
      _
    $region15: #{gnn_critic2_forward.1} parent=1 // pred_check_branch
      %27 = sbr.rel (0) target = $region17
    $region16: #{gnn_critic2_forward.1} parent=1 // pred_region
      _
    $region17: #{gnn_critic2_forward.1} parent=1 // pred_fallthru
      _
    // Predicated region
    $region18: #{gnn_critic2_forward.1} parent=1 // pred_check
      _
    $region19: #{gnn_critic2_forward.1} parent=1 // pred_check_branch
      %29 = sbr.rel (0) target = $region21
    $region20: #{gnn_critic2_forward.1} parent=1 // pred_region
      %30 = dma.done [#allocation3], 5632
    $region21: #{gnn_critic2_forward.1} parent=1 // pred_fallthru
      _
    %v32 = vld [vmem:[%s0] sm:$0x3f]
    %v33 = vld [vmem:[%s0 + $0x8] sm:$0x3f]
    %v34 = vld [vmem:[%s0 + $0x10] sm:$0x3f]
    %v35 = vld [vmem:[%s0 + $0x18] sm:$0x3f]
    %v36 = vld [vmem:[%s1] sm:$0xf]
    %v37 = vld [vmem:[#allocation2] sm:$0x7]
    %v38 = vld [vmem:[#allocation2 + $0x10] sm:$0xf]
    %v39 = vld [vmem:[#allocation2 + $0x18] sm:$0xf]
    %v40 = vld [vmem:[#allocation2 + $0x20] sm:$0x7]
    %v41 = vld [vmem:[#allocation2 + $0x30] sm:$0xff]
    %v42 = vld [vmem:[#allocation2 + $0x38] sm:$0xff]
    %v43 = vld [vmem:[#allocation2 + $0x40] sm:$0x77]
    %v44 = vld [vmem:[#allocation2 + $0x50] sm:$0x77]
    %v45 = vld [vmem:[#allocation2 + $0x60] sm:$0xff]
    %v46 = vld [vmem:[#allocation2 + $0x68] sm:$0xff]
    %v47 = vld [vmem:[#allocation2 + $0x70] sm:$0xff]
    %v48 = vld [vmem:[#allocation2 + $0x78] sm:$0xff]
    %v49 = vld [vmem:[#allocation2 + $0x80] sm:$0xff]
    %v50 = vld [vmem:[#allocation2 + $0x88] sm:$0xff]
    %v51 = vld [vmem:[#allocation2 + $0x90] sm:$0xff]
    %v52 = vld [vmem:[#allocation2 + $0x98] sm:$0xff]
    %v53 = vld [vmem:[#allocation2 + $0xa0] sm:$0xff]
    %v54 = vld [vmem:[#allocation2 + $0xa8] sm:$0xff]
    %v55 = vld [vmem:[#allocation2 + $0xb0] sm:$0xff]
    %v56 = vld [vmem:[#allocation2 + $0xb8] sm:$0xff]
    %v57 = vld [vmem:[#allocation2 + $0xc0] sm:$0xff]
    %v58 = vld [vmem:[#allocation2 + $0xc8] sm:$0xff]
    %v59 = vld [vmem:[#allocation2 + $0xd0] sm:$0xff]
    %v60 = vld [vmem:[#allocation2 + $0xd8] sm:$0xff]
    %v61 = vld [vmem:[#allocation2 + $0xe0] sm:$0xff]
    %v62 = vld [vmem:[#allocation2 + $0xe8] sm:$0xff]
    %v63 = vld [vmem:[#allocation2 + $0xf0] sm:$0xff]
    %v64 = vld [vmem:[#allocation2 + $0xf8] sm:$0xff]
    %v65 = vld [vmem:[#allocation2 + $0x100] sm:$0xff]
    %v66 = vld [vmem:[#allocation2 + $0x108] sm:$0xff]
    %v67 = vld [vmem:[#allocation2 + $0x110] sm:$0xff]
    %v68 = vld [vmem:[#allocation2 + $0x118] sm:$0xff]
    %v69 = vld [vmem:[#allocation2 + $0x120] sm:$0xff]
    %v70 = vld [vmem:[#allocation2 + $0x128] sm:$0xff]
    %v71 = vld [vmem:[#allocation2 + $0x130] sm:$0xff]
    %v72 = vld [vmem:[#allocation2 + $0x138] sm:$0xff]
    %v73 = vld [vmem:[#allocation2 + $0x140] sm:$0xff]
    %v74 = vld [vmem:[#allocation2 + $0x148] sm:$0xff]
    %v75 = vld [vmem:[#allocation2 + $0x150] sm:$0xff]
    %v76 = vld [vmem:[#allocation2 + $0x158] sm:$0xff]
    %v77 = vld [vmem:[%s3] ss:$0 sm:$0xff]
    %s78 = scalar_lea.vmem %s3, 1
    %v79 = vld [vmem:[%s78] ss:$8 sm:$0x3]
    %s80 = scalar_lea.vmem %s3, 2
    %v81 = vld [vmem:[%s80] ss:$8 sm:$0x3]
    %s82 = scalar_lea.vmem %s3, 3
    %v83 = vld [vmem:[%s82] ss:$8 sm:$0x3]
    %v84 = vld [vmem:[%s3 + $0x4] ss:$0 sm:$0xff]
    %v85 = vpack.c.bf16 %v32, %v32
    %v86 = vpack.c.bf16 %v33, %v33
    %v87 = vpack.c.bf16 %v34, %v34
    %v88 = vpack.c.bf16 %v35, %v35
    %v92 = vunpack.c.l.b16 %v38
    %v93 = vunpack.c.l.b16 %v39
    %v94 = vunpack.c.l.b16 %v40
    %v95 = vpack.c.b16 %v93, %v92
    %v96 = vpack.c.b16 %v94, %v94
    %vm98 = vcmask 171008
    %v100 = vsel %vm98, %v85, 0
    %vm102 = vcmask 1041408
    %vm103 = vcmask 1042432
    %v104 = vsel %vm102, 4294967295, 65535
    %v105 = vsel %vm103, %v104, 0
    %v107 = vand.u32 %v96, %v105
    %109 = vmatprep.subr.bf16.mxu0 0
    %110 = vmatpush1.bf16.msra.mxu0 0
    %111 = vmatprep.subr.bf16.mxu0 0
    %112 = vmatpush1.bf16.msra.mxu0 0
    %113 = vmatprep.subr.bf16.mxu0 0
    %114 = vmatpush1.bf16.msra.mxu0 0
    %115 = vmatprep.subr.bf16.mxu0 0
    %116 = vmatpush1.bf16.msra.mxu0 0
    %117 = vmatprep.subr.bf16.mxu0 0
    %118 = vmatpush1.bf16.msra.mxu0 0
    %119 = vmatprep.subr.bf16.mxu0 0
    %120 = vmatpush1.bf16.msra.mxu0 0
    %121 = vmatprep.subr.bf16.mxu0 0
    %122 = vmatpush1.bf16.msra.mxu0 %v107
    %123 = vmatprep.subr.bf16.mxu0 0
    %124 = vmatpush1.bf16.msra.mxu0 %v95
    %125 = vmatprep.subr.bf16.mxu0 0
    %126 = vmatpush2.bf16.msra.mxu0 0
    %127 = vmatprep.subr.bf16.mxu0 0
    %128 = vmatpush2.bf16.msra.mxu0 0
    %129 = vmatprep.subr.bf16.mxu0 0
    %130 = vmatpush2.bf16.msra.mxu0 0
    %131 = vmatprep.subr.bf16.mxu0 0
    %132 = vmatpush2.bf16.msra.mxu0 0
    %133 = vmatprep.subr.bf16.mxu0 0
    %134 = vmatpush2.bf16.msra.mxu0 0
    %135 = vmatprep.subr.bf16.mxu0 0
    %136 = vmatpush2.bf16.msra.mxu0 0
    %137 = vmatprep.subr.bf16.mxu0 0
    %138 = vmatpush2.bf16.msra.mxu0 0
    %139 = vmatprep.subr.bf16.mxu0 0
    %140 = vmatpush2.bf16.msra.mxu0 0
    %141 = vmatprep.mubr.bf16.mxu0 0
    %142 = vmatmul.mubr.bf16.gmra.mxu0 %v100
    %v143 = vpop.f32.mrf.mxu0
    %v144 = vadd.f32 0.0, %v143
    %v145 = vpop.f32.mrf.mxu0
    %v146 = vpop.f32.mrf.mxu0
    %v147 = vpop.f32.mrf.mxu0
    %148 = vdwg.mxu0
    %v150 = vsel %vm98, %v86, 0
    %152 = vmatprep.subr.bf16.mxu0 0
    %153 = vmatpush1.bf16.msra.mxu0 0
    %154 = vmatprep.subr.bf16.mxu0 0
    %155 = vmatpush1.bf16.msra.mxu0 0
    %156 = vmatprep.subr.bf16.mxu0 0
    %157 = vmatpush1.bf16.msra.mxu0 0
    %158 = vmatprep.subr.bf16.mxu0 0
    %159 = vmatpush1.bf16.msra.mxu0 0
    %160 = vmatprep.subr.bf16.mxu0 0
    %161 = vmatpush1.bf16.msra.mxu0 0
    %162 = vmatprep.subr.bf16.mxu0 0
    %163 = vmatpush1.bf16.msra.mxu0 0
    %164 = vmatprep.subr.bf16.mxu0 0
    %165 = vmatpush1.bf16.msra.mxu0 %v107
    %166 = vmatprep.subr.bf16.mxu0 0
    %167 = vmatpush1.bf16.msra.mxu0 %v95
    %168 = vmatprep.subr.bf16.mxu0 0
    %169 = vmatpush2.bf16.msra.mxu0 0
    %170 = vmatprep.subr.bf16.mxu0 0
    %171 = vmatpush2.bf16.msra.mxu0 0
    %172 = vmatprep.subr.bf16.mxu0 0
    %173 = vmatpush2.bf16.msra.mxu0 0
    %174 = vmatprep.subr.bf16.mxu0 0
    %175 = vmatpush2.bf16.msra.mxu0 0
    %176 = vmatprep.subr.bf16.mxu0 0
    %177 = vmatpush2.bf16.msra.mxu0 0
    %178 = vmatprep.subr.bf16.mxu0 0
    %179 = vmatpush2.bf16.msra.mxu0 0
    %180 = vmatprep.subr.bf16.mxu0 0
    %181 = vmatpush2.bf16.msra.mxu0 0
    %182 = vmatprep.subr.bf16.mxu0 0
    %183 = vmatpush2.bf16.msra.mxu0 0
    %184 = vmatprep.mubr.bf16.mxu0 0
    %185 = vmatmul.mubr.bf16.gmra.mxu0 %v150
    %v186 = vpop.f32.mrf.mxu0
    %v187 = vadd.f32 0.0, %v186
    %v188 = vpop.f32.mrf.mxu0
    %v189 = vpop.f32.mrf.mxu0
    %v190 = vpop.f32.mrf.mxu0
    %191 = vdwg.mxu0
    %v193 = vsel %vm98, %v87, 0
    %195 = vmatprep.subr.bf16.mxu0 0
    %196 = vmatpush1.bf16.msra.mxu0 0
    %197 = vmatprep.subr.bf16.mxu0 0
    %198 = vmatpush1.bf16.msra.mxu0 0
    %199 = vmatprep.subr.bf16.mxu0 0
    %200 = vmatpush1.bf16.msra.mxu0 0
    %201 = vmatprep.subr.bf16.mxu0 0
    %202 = vmatpush1.bf16.msra.mxu0 0
    %203 = vmatprep.subr.bf16.mxu0 0
    %204 = vmatpush1.bf16.msra.mxu0 0
    %205 = vmatprep.subr.bf16.mxu0 0
    %206 = vmatpush1.bf16.msra.mxu0 0
    %207 = vmatprep.subr.bf16.mxu0 0
    %208 = vmatpush1.bf16.msra.mxu0 %v107
    %209 = vmatprep.subr.bf16.mxu0 0
    %210 = vmatpush1.bf16.msra.mxu0 %v95
    %211 = vmatprep.subr.bf16.mxu0 0
    %212 = vmatpush2.bf16.msra.mxu0 0
    %213 = vmatprep.subr.bf16.mxu0 0
    %214 = vmatpush2.bf16.msra.mxu0 0
    %215 = vmatprep.subr.bf16.mxu0 0
    %216 = vmatpush2.bf16.msra.mxu0 0
    %217 = vmatprep.subr.bf16.mxu0 0
    %218 = vmatpush2.bf16.msra.mxu0 0
    %219 = vmatprep.subr.bf16.mxu0 0
    %220 = vmatpush2.bf16.msra.mxu0 0
    %221 = vmatprep.subr.bf16.mxu0 0
    %222 = vmatpush2.bf16.msra.mxu0 0
    %223 = vmatprep.subr.bf16.mxu0 0
    %224 = vmatpush2.bf16.msra.mxu0 0
    %225 = vmatprep.subr.bf16.mxu0 0
    %226 = vmatpush2.bf16.msra.mxu0 0
    %227 = vmatprep.mubr.bf16.mxu0 0
    %228 = vmatmul.mubr.bf16.gmra.mxu0 %v193
    %v229 = vpop.f32.mrf.mxu0
    %v230 = vadd.f32 0.0, %v229
    %v231 = vpop.f32.mrf.mxu0
    %v232 = vpop.f32.mrf.mxu0
    %v233 = vpop.f32.mrf.mxu0
    %234 = vdwg.mxu0
    %v236 = vsel %vm98, %v88, 0
    %238 = vmatprep.subr.bf16.mxu0 0
    %239 = vmatpush1.bf16.msra.mxu0 0
    %240 = vmatprep.subr.bf16.mxu0 0
    %241 = vmatpush1.bf16.msra.mxu0 0
    %242 = vmatprep.subr.bf16.mxu0 0
    %243 = vmatpush1.bf16.msra.mxu0 0
    %244 = vmatprep.subr.bf16.mxu0 0
    %245 = vmatpush1.bf16.msra.mxu0 0
    %246 = vmatprep.subr.bf16.mxu0 0
    %247 = vmatpush1.bf16.msra.mxu0 0
    %248 = vmatprep.subr.bf16.mxu0 0
    %249 = vmatpush1.bf16.msra.mxu0 0
    %250 = vmatprep.subr.bf16.mxu0 0
    %251 = vmatpush1.bf16.msra.mxu0 %v107
    %252 = vmatprep.subr.bf16.mxu0 0
    %253 = vmatpush1.bf16.msra.mxu0 %v95
    %254 = vmatprep.subr.bf16.mxu0 0
    %255 = vmatpush2.bf16.msra.mxu0 0
    %256 = vmatprep.subr.bf16.mxu0 0
    %257 = vmatpush2.bf16.msra.mxu0 0
    %258 = vmatprep.subr.bf16.mxu0 0
    %259 = vmatpush2.bf16.msra.mxu0 0
    %260 = vmatprep.subr.bf16.mxu0 0
    %261 = vmatpush2.bf16.msra.mxu0 0
    %262 = vmatprep.subr.bf16.mxu0 0
    %263 = vmatpush2.bf16.msra.mxu0 0
    %264 = vmatprep.subr.bf16.mxu0 0
    %265 = vmatpush2.bf16.msra.mxu0 0
    %266 = vmatprep.subr.bf16.mxu0 0
    %267 = vmatpush2.bf16.msra.mxu0 0
    %268 = vmatprep.subr.bf16.mxu0 0
    %269 = vmatpush2.bf16.msra.mxu0 0
    %270 = vmatprep.mubr.bf16.mxu0 0
    %271 = vmatmul.mubr.bf16.gmra.mxu0 %v236
    %v272 = vpop.f32.mrf.mxu0
    %v273 = vadd.f32 0.0, %v272
    %v274 = vpop.f32.mrf.mxu0
    %v275 = vpop.f32.mrf.mxu0
    %v276 = vpop.f32.mrf.mxu0
    %277 = vdwg.mxu0
    %v278 = vpack.c.bf16 %v144, %v144
    %v279 = vpack.c.bf16 %v187, %v187
    %v280 = vpack.c.bf16 %v230, %v230
    %v281 = vpack.c.bf16 %v273, %v273
    %vm282 = vcmask 48128
    %v284 = vsel %vm282, %v37, 0
    %v287 = vsel %vm103, %v278, 0
    %289 = vmatprep.subr.bf16.mxu0 0
    %290 = vmatpush1.bf16.msra.mxu0 0
    %291 = vmatprep.subr.bf16.mxu0 0
    %292 = vmatpush1.bf16.msra.mxu0 0
    %293 = vmatprep.subr.bf16.mxu0 0
    %294 = vmatpush1.bf16.msra.mxu0 0
    %295 = vmatprep.subr.bf16.mxu0 0
    %296 = vmatpush1.bf16.msra.mxu0 0
    %297 = vmatprep.subr.bf16.mxu0 0
    %298 = vmatpush1.bf16.msra.mxu0 0
    %299 = vmatprep.subr.bf16.mxu0 0
    %300 = vmatpush1.bf16.msra.mxu0 0
    %301 = vmatprep.subr.bf16.mxu0 0
    %302 = vmatpush1.bf16.msra.mxu0 0
    %303 = vmatprep.subr.bf16.mxu0 0
    %304 = vmatpush1.bf16.msra.mxu0 %v287
    %305 = vmatprep.subr.bf16.mxu0 0
    %306 = vmatpush2.bf16.msra.mxu0 0
    %307 = vmatprep.subr.bf16.mxu0 0
    %308 = vmatpush2.bf16.msra.mxu0 0
    %309 = vmatprep.subr.bf16.mxu0 0
    %310 = vmatpush2.bf16.msra.mxu0 0
    %311 = vmatprep.subr.bf16.mxu0 0
    %312 = vmatpush2.bf16.msra.mxu0 0
    %313 = vmatprep.subr.bf16.mxu0 0
    %314 = vmatpush2.bf16.msra.mxu0 0
    %315 = vmatprep.subr.bf16.mxu0 0
    %316 = vmatpush2.bf16.msra.mxu0 0
    %317 = vmatprep.subr.bf16.mxu0 0
    %318 = vmatpush2.bf16.msra.mxu0 0
    %319 = vmatprep.subr.bf16.mxu0 0
    %320 = vmatpush2.bf16.msra.mxu0 0
    %321 = vmatprep.mubr.bf16.mxu0 0
    %322 = vmatmul.mubr.bf16.gmra.mxu0 %v284
    %v323 = vpop.f32.mrf.mxu0
    %v324 = vadd.f32 %v77, %v323
    %v325 = vpop.f32.mrf.mxu0
    %v326 = vpop.f32.mrf.mxu0
    %v327 = vpop.f32.mrf.mxu0
    %328 = vdwg.mxu0
    %v330 = vsel %vm103, %v279, 0
    %332 = vmatprep.subr.bf16.mxu0 0
    %333 = vmatpush1.bf16.msra.mxu0 0
    %334 = vmatprep.subr.bf16.mxu0 0
    %335 = vmatpush1.bf16.msra.mxu0 0
    %336 = vmatprep.subr.bf16.mxu0 0
    %337 = vmatpush1.bf16.msra.mxu0 0
    %338 = vmatprep.subr.bf16.mxu0 0
    %339 = vmatpush1.bf16.msra.mxu0 0
    %340 = vmatprep.subr.bf16.mxu0 0
    %341 = vmatpush1.bf16.msra.mxu0 0
    %342 = vmatprep.subr.bf16.mxu0 0
    %343 = vmatpush1.bf16.msra.mxu0 0
    %344 = vmatprep.subr.bf16.mxu0 0
    %345 = vmatpush1.bf16.msra.mxu0 0
    %346 = vmatprep.subr.bf16.mxu0 0
    %347 = vmatpush1.bf16.msra.mxu0 %v330
    %348 = vmatprep.subr.bf16.mxu0 0
    %349 = vmatpush2.bf16.msra.mxu0 0
    %350 = vmatprep.subr.bf16.mxu0 0
    %351 = vmatpush2.bf16.msra.mxu0 0
    %352 = vmatprep.subr.bf16.mxu0 0
    %353 = vmatpush2.bf16.msra.mxu0 0
    %354 = vmatprep.subr.bf16.mxu0 0
    %355 = vmatpush2.bf16.msra.mxu0 0
    %356 = vmatprep.subr.bf16.mxu0 0
    %357 = vmatpush2.bf16.msra.mxu0 0
    %358 = vmatprep.subr.bf16.mxu0 0
    %359 = vmatpush2.bf16.msra.mxu0 0
    %360 = vmatprep.subr.bf16.mxu0 0
    %361 = vmatpush2.bf16.msra.mxu0 0
    %362 = vmatprep.subr.bf16.mxu0 0
    %363 = vmatpush2.bf16.msra.mxu0 0
    %364 = vmatprep.mubr.bf16.mxu0 0
    %365 = vmatmul.mubr.bf16.gmra.mxu0 %v284
    %v366 = vpop.f32.mrf.mxu0
    %v367 = vadd.f32 %v77, %v366
    %v368 = vpop.f32.mrf.mxu0
    %v369 = vpop.f32.mrf.mxu0
    %v370 = vpop.f32.mrf.mxu0
    %371 = vdwg.mxu0
    %v373 = vsel %vm103, %v280, 0
    %375 = vmatprep.subr.bf16.mxu0 0
    %376 = vmatpush1.bf16.msra.mxu0 0
    %377 = vmatprep.subr.bf16.mxu0 0
    %378 = vmatpush1.bf16.msra.mxu0 0
    %379 = vmatprep.subr.bf16.mxu0 0
    %380 = vmatpush1.bf16.msra.mxu0 0
    %381 = vmatprep.subr.bf16.mxu0 0
    %382 = vmatpush1.bf16.msra.mxu0 0
    %383 = vmatprep.subr.bf16.mxu0 0
    %384 = vmatpush1.bf16.msra.mxu0 0
    %385 = vmatprep.subr.bf16.mxu0 0
    %386 = vmatpush1.bf16.msra.mxu0 0
    %387 = vmatprep.subr.bf16.mxu0 0
    %388 = vmatpush1.bf16.msra.mxu0 0
    %389 = vmatprep.subr.bf16.mxu0 0
    %390 = vmatpush1.bf16.msra.mxu0 %v373
    %391 = vmatprep.subr.bf16.mxu0 0
    %392 = vmatpush2.bf16.msra.mxu0 0
    %393 = vmatprep.subr.bf16.mxu0 0
    %394 = vmatpush2.bf16.msra.mxu0 0
    %395 = vmatprep.subr.bf16.mxu0 0
    %396 = vmatpush2.bf16.msra.mxu0 0
    %397 = vmatprep.subr.bf16.mxu0 0
    %398 = vmatpush2.bf16.msra.mxu0 0
    %399 = vmatprep.subr.bf16.mxu0 0
    %400 = vmatpush2.bf16.msra.mxu0 0
    %401 = vmatprep.subr.bf16.mxu0 0
    %402 = vmatpush2.bf16.msra.mxu0 0
    %403 = vmatprep.subr.bf16.mxu0 0
    %404 = vmatpush2.bf16.msra.mxu0 0
    %405 = vmatprep.subr.bf16.mxu0 0
    %406 = vmatpush2.bf16.msra.mxu0 0
    %407 = vmatprep.mubr.bf16.mxu0 0
    %408 = vmatmul.mubr.bf16.gmra.mxu0 %v284
    %v409 = vpop.f32.mrf.mxu0
    %v410 = vadd.f32 %v77, %v409
    %v411 = vpop.f32.mrf.mxu0
    %v412 = vpop.f32.mrf.mxu0
    %v413 = vpop.f32.mrf.mxu0
    %414 = vdwg.mxu0
    %v416 = vsel %vm103, %v281, 0
    %418 = vmatprep.subr.bf16.mxu0 0
    %419 = vmatpush1.bf16.msra.mxu0 0
    %420 = vmatprep.subr.bf16.mxu0 0
    %421 = vmatpush1.bf16.msra.mxu0 0
    %422 = vmatprep.subr.bf16.mxu0 0
    %423 = vmatpush1.bf16.msra.mxu0 0
    %424 = vmatprep.subr.bf16.mxu0 0
    %425 = vmatpush1.bf16.msra.mxu0 0
    %426 = vmatprep.subr.bf16.mxu0 0
    %427 = vmatpush1.bf16.msra.mxu0 0
    %428 = vmatprep.subr.bf16.mxu0 0
    %429 = vmatpush1.bf16.msra.mxu0 0
    %430 = vmatprep.subr.bf16.mxu0 0
    %431 = vmatpush1.bf16.msra.mxu0 0
    %432 = vmatprep.subr.bf16.mxu0 0
    %433 = vmatpush1.bf16.msra.mxu0 %v416
    %434 = vmatprep.subr.bf16.mxu0 0
    %435 = vmatpush2.bf16.msra.mxu0 0
    %436 = vmatprep.subr.bf16.mxu0 0
    %437 = vmatpush2.bf16.msra.mxu0 0
    %438 = vmatprep.subr.bf16.mxu0 0
    %439 = vmatpush2.bf16.msra.mxu0 0
    %440 = vmatprep.subr.bf16.mxu0 0
    %441 = vmatpush2.bf16.msra.mxu0 0
    %442 = vmatprep.subr.bf16.mxu0 0
    %443 = vmatpush2.bf16.msra.mxu0 0
    %444 = vmatprep.subr.bf16.mxu0 0
    %445 = vmatpush2.bf16.msra.mxu0 0
    %446 = vmatprep.subr.bf16.mxu0 0
    %447 = vmatpush2.bf16.msra.mxu0 0
    %448 = vmatprep.subr.bf16.mxu0 0
    %449 = vmatpush2.bf16.msra.mxu0 0
    %450 = vmatprep.mubr.bf16.mxu0 0
    %451 = vmatmul.mubr.bf16.gmra.mxu0 %v284
    %v452 = vpop.f32.mrf.mxu0
    %v453 = vadd.f32 %v77, %v452
    %v454 = vpop.f32.mrf.mxu0
    %v455 = vpop.f32.mrf.mxu0
    %v456 = vpop.f32.mrf.mxu0
    %457 = vdwg.mxu0
    %v458 = vmax.f32 %v324, 0.0
    %v459 = vmax.f32 %v367, 0.0
    %v460 = vmax.f32 %v410, 0.0
    %v461 = vmax.f32 %v453, 0.0
    %v462 = vadd.f32 %v458, %v32
    %v463 = vadd.f32 %v459, %v33
    %v464 = vadd.f32 %v460, %v34
    %v465 = vadd.f32 %v461, %v35
    %vm466 = vcmask 168960
    %v467 = vsel %vm466, %v462, 0.0
    %v468 = vrot.slane %v467, 4
    %v469 = vadd.f32 %v467, %v468
    %v470 = vrot.slane %v469, 2
    %v471 = vadd.f32 %v469, %v470
    %v472 = vrot.slane %v471, 1
    %v473 = vadd.f32 %v471, %v472
    %v474 = vsel %vm466, %v463, 0.0
    %v475 = vrot.slane %v474, 4
    %v476 = vadd.f32 %v474, %v475
    %v477 = vrot.slane %v476, 2
    %v478 = vadd.f32 %v476, %v477
    %v479 = vrot.slane %v478, 1
    %v480 = vadd.f32 %v478, %v479
    %v481 = vsel %vm466, %v464, 0.0
    %v482 = vrot.slane %v481, 4
    %v483 = vadd.f32 %v481, %v482
    %v484 = vrot.slane %v483, 2
    %v485 = vadd.f32 %v483, %v484
    %v486 = vrot.slane %v485, 1
    %v487 = vadd.f32 %v485, %v486
    %v488 = vsel %vm466, %v465, 0.0
    %v489 = vrot.slane %v488, 4
    %v490 = vadd.f32 %v488, %v489
    %v491 = vrot.slane %v490, 2
    %v492 = vadd.f32 %v490, %v491
    %v493 = vrot.slane %v492, 1
    %v494 = vadd.f32 %v492, %v493
    %v495 = vpack.c.bf16 %v473, %v473
    %v496 = vpack.c.bf16 %v480, %v480
    %v497 = vpack.c.bf16 %v487, %v487
    %v498 = vpack.c.bf16 %v494, %v494
    %v499 = vpack.c.bf16 %v36, %v36
    %v501 = vunpack.c.l.b16 %v44
    %v502 = vunpack.c.h.b16 %v44
    %v503 = vpack.c.b16 %v501, %v501
    %v504 = vpack.c.b16 %v502, %v502
    %v506 = vsel %vm282, %v499, 0
    %v509 = vsel %vm103, %v503, 0
    %v512 = vsel %vm103, %v504, 0
    %514 = vmatprep.subr.bf16.mxu0 0
    %515 = vmatpush1.bf16.msra.mxu0 0
    %516 = vmatprep.subr.bf16.mxu0 0
    %517 = vmatpush1.bf16.msra.mxu0 0
    %518 = vmatprep.subr.bf16.mxu0 0
    %519 = vmatpush1.bf16.msra.mxu0 0
    %520 = vmatprep.subr.bf16.mxu0 0
    %521 = vmatpush1.bf16.msra.mxu0 0
    %522 = vmatprep.subr.bf16.mxu0 0
    %523 = vmatpush1.bf16.msra.mxu0 0
    %524 = vmatprep.subr.bf16.mxu0 0
    %525 = vmatpush1.bf16.msra.mxu0 0
    %526 = vmatprep.subr.bf16.mxu0 0
    %527 = vmatpush1.bf16.msra.mxu0 0
    %528 = vmatprep.subr.bf16.mxu0 %v512
    %529 = vmatpush1.bf16.msra.mxu0 %v509
    %530 = vmatprep.subr.bf16.mxu0 0
    %531 = vmatpush2.bf16.msra.mxu0 0
    %532 = vmatprep.subr.bf16.mxu0 0
    %533 = vmatpush2.bf16.msra.mxu0 0
    %534 = vmatprep.subr.bf16.mxu0 0
    %535 = vmatpush2.bf16.msra.mxu0 0
    %536 = vmatprep.subr.bf16.mxu0 0
    %537 = vmatpush2.bf16.msra.mxu0 0
    %538 = vmatprep.subr.bf16.mxu0 0
    %539 = vmatpush2.bf16.msra.mxu0 0
    %540 = vmatprep.subr.bf16.mxu0 0
    %541 = vmatpush2.bf16.msra.mxu0 0
    %542 = vmatprep.subr.bf16.mxu0 0
    %543 = vmatpush2.bf16.msra.mxu0 0
    %544 = vmatprep.subr.bf16.mxu0 0
    %545 = vmatpush2.bf16.msra.mxu0 0
    %546 = vmatprep.mubr.bf16.mxu0 0
    %547 = vmatmul.mubr.bf16.gmra.mxu0 %v506
    %v548 = vpop.f32.mrf.mxu0
    %v549 = vadd.f32 0.0, %v548
    %v550 = vpop.f32.mrf.mxu0
    %v551 = vadd.f32 0.0, %v550
    %v552 = vpop.f32.mrf.mxu0
    %v553 = vpop.f32.mrf.mxu0
    %554 = vdwg.mxu0
    %v559 = vunpack.c.l.b16 %v495
    %v560 = vunpack.c.l.b16 %v496
    %v561 = vunpack.c.l.b16 %v497
    %v562 = vunpack.c.l.b16 %v498
    %vm563 = vcmask 1041409
    %v564 = vsel %vm563, %v560, %v559
    %vm565 = vcmask 1042434
    %v566 = vsel %vm565, %v561, %v564
    %vm567 = vcmask 1043459
    %v568 = vsel %vm567, %v562, %v566
    %v569 = vpack.c.b16 %v568, %v568
    %v573 = vunpack.c.l.b16 %v41
    %v574 = vunpack.c.h.b16 %v41
    %v575 = vunpack.c.l.b16 %v42
    %v576 = vunpack.c.h.b16 %v42
    %v577 = vunpack.c.l.b16 %v43
    %v578 = vunpack.c.h.b16 %v43
    %v579 = vpack.c.b16 %v575, %v573
    %v580 = vpack.c.b16 %v576, %v574
    %v581 = vpack.c.b16 %v577, %v577
    %v582 = vpack.c.b16 %v578, %v578
    %v586 = vsel %vm98, %v569, 0
    %v589 = vand.u32 %v581, %v105
    %v592 = vand.u32 %v582, %v105
    %594 = vmatprep.subr.bf16.mxu0 0
    %595 = vmatpush1.bf16.msra.mxu0 0
    %596 = vmatprep.subr.bf16.mxu0 0
    %597 = vmatpush1.bf16.msra.mxu0 0
    %598 = vmatprep.subr.bf16.mxu0 0
    %599 = vmatpush1.bf16.msra.mxu0 0
    %600 = vmatprep.subr.bf16.mxu0 0
    %601 = vmatpush1.bf16.msra.mxu0 0
    %602 = vmatprep.subr.bf16.mxu0 0
    %603 = vmatpush1.bf16.msra.mxu0 0
    %604 = vmatprep.subr.bf16.mxu0 0
    %605 = vmatpush1.bf16.msra.mxu0 0
    %606 = vmatprep.subr.bf16.mxu0 %v592
    %607 = vmatpush1.bf16.msra.mxu0 %v589
    %608 = vmatprep.subr.bf16.mxu0 %v580
    %609 = vmatpush1.bf16.msra.mxu0 %v579
    %610 = vmatprep.subr.bf16.mxu0 0
    %611 = vmatpush2.bf16.msra.mxu0 0
    %612 = vmatprep.subr.bf16.mxu0 0
    %613 = vmatpush2.bf16.msra.mxu0 0
    %614 = vmatprep.subr.bf16.mxu0 0
    %615 = vmatpush2.bf16.msra.mxu0 0
    %616 = vmatprep.subr.bf16.mxu0 0
    %617 = vmatpush2.bf16.msra.mxu0 0
    %618 = vmatprep.subr.bf16.mxu0 0
    %619 = vmatpush2.bf16.msra.mxu0 0
    %620 = vmatprep.subr.bf16.mxu0 0
    %621 = vmatpush2.bf16.msra.mxu0 0
    %622 = vmatprep.subr.bf16.mxu0 0
    %623 = vmatpush2.bf16.msra.mxu0 0
    %624 = vmatprep.subr.bf16.mxu0 0
    %625 = vmatpush2.bf16.msra.mxu0 0
    %626 = vmatprep.mubr.bf16.mxu0 0
    %627 = vmatmul.mubr.bf16.gmra.mxu0 %v586
    %v628 = vpop.f32.mrf.mxu0
    %v629 = vadd.f32 %v549, %v628
    %v630 = vpop.f32.mrf.mxu0
    %v631 = vadd.f32 %v551, %v630
    %v632 = vpop.f32.mrf.mxu0
    %v633 = vpop.f32.mrf.mxu0
    %634 = vdwg.mxu0
    %v636 = vlaneseq
    %v637 = vshrl.u32 %v636, 7
    %v638 = vsub.s32 0, %v637
    %v639 = vrot.slane %v79, %v638
    %v640 = vlaneseq
    %v641 = vshrl.u32 %v640, 7
    %v642 = vsub.s32 1, %v641
    %v643 = vrot.slane %v79, %v642
    %v646 = vadd.f32 %v629, %v639
    %v647 = vadd.f32 %v631, %v643
    %v648 = vmax.f32 %v646, 0.0
    %v649 = vmax.f32 %v647, 0.0
    %v650 = vpack.c.bf16 %v648, %v648
    %v651 = vpack.c.bf16 %v649, %v649
    %v653 = vlaneseq
    %v654 = vshrl.u32 %v653, 7
    %v655 = vsub.s32 0, %v654
    %v656 = vrot.slane %v81, %v655
    %v657 = vlaneseq
    %v658 = vshrl.u32 %v657, 7
    %v659 = vsub.s32 1, %v658
    %v660 = vrot.slane %v81, %v659
    %v695 = vunpack.c.l.b16 %v45
    %v696 = vunpack.c.h.b16 %v45
    %v697 = vunpack.c.l.b16 %v46
    %v698 = vunpack.c.h.b16 %v46
    %v699 = vunpack.c.l.b16 %v47
    %v700 = vunpack.c.h.b16 %v47
    %v701 = vunpack.c.l.b16 %v48
    %v702 = vunpack.c.h.b16 %v48
    %v703 = vunpack.c.l.b16 %v49
    %v704 = vunpack.c.h.b16 %v49
    %v705 = vunpack.c.l.b16 %v50
    %v706 = vunpack.c.h.b16 %v50
    %v707 = vunpack.c.l.b16 %v51
    %v708 = vunpack.c.h.b16 %v51
    %v709 = vunpack.c.l.b16 %v52
    %v710 = vunpack.c.h.b16 %v52
    %v711 = vunpack.c.l.b16 %v53
    %v712 = vunpack.c.h.b16 %v53
    %v713 = vunpack.c.l.b16 %v54
    %v714 = vunpack.c.h.b16 %v54
    %v715 = vunpack.c.l.b16 %v55
    %v716 = vunpack.c.h.b16 %v55
    %v717 = vunpack.c.l.b16 %v56
    %v718 = vunpack.c.h.b16 %v56
    %v719 = vunpack.c.l.b16 %v57
    %v720 = vunpack.c.h.b16 %v57
    %v721 = vunpack.c.l.b16 %v58
    %v722 = vunpack.c.h.b16 %v58
    %v723 = vunpack.c.l.b16 %v59
    %v724 = vunpack.c.h.b16 %v59
    %v725 = vunpack.c.l.b16 %v60
    %v726 = vunpack.c.h.b16 %v60
    %v727 = vunpack.c.l.b16 %v61
    %v728 = vunpack.c.h.b16 %v61
    %v729 = vunpack.c.l.b16 %v62
    %v730 = vunpack.c.h.b16 %v62
    %v731 = vunpack.c.l.b16 %v63
    %v732 = vunpack.c.h.b16 %v63
    %v733 = vunpack.c.l.b16 %v64
    %v734 = vunpack.c.h.b16 %v64
    %v735 = vunpack.c.l.b16 %v65
    %v736 = vunpack.c.h.b16 %v65
    %v737 = vunpack.c.l.b16 %v66
    %v738 = vunpack.c.h.b16 %v66
    %v739 = vunpack.c.l.b16 %v67
    %v740 = vunpack.c.h.b16 %v67
    %v741 = vunpack.c.l.b16 %v68
    %v742 = vunpack.c.h.b16 %v68
    %v743 = vunpack.c.l.b16 %v69
    %v744 = vunpack.c.h.b16 %v69
    %v745 = vunpack.c.l.b16 %v70
    %v746 = vunpack.c.h.b16 %v70
    %v747 = vunpack.c.l.b16 %v71
    %v748 = vunpack.c.h.b16 %v71
    %v749 = vunpack.c.l.b16 %v72
    %v750 = vunpack.c.h.b16 %v72
    %v751 = vunpack.c.l.b16 %v73
    %v752 = vunpack.c.h.b16 %v73
    %v753 = vunpack.c.l.b16 %v74
    %v754 = vunpack.c.h.b16 %v74
    %v755 = vunpack.c.l.b16 %v75
    %v756 = vunpack.c.h.b16 %v75
    %v757 = vunpack.c.l.b16 %v76
    %v758 = vunpack.c.h.b16 %v76
    %v759 = vpack.c.b16 %v697, %v695
    %v760 = vpack.c.b16 %v698, %v696
    %v761 = vpack.c.b16 %v701, %v699
    %v762 = vpack.c.b16 %v702, %v700
    %v763 = vpack.c.b16 %v705, %v703
    %v764 = vpack.c.b16 %v706, %v704
    %v765 = vpack.c.b16 %v709, %v707
    %v766 = vpack.c.b16 %v710, %v708
    %v767 = vpack.c.b16 %v713, %v711
    %v768 = vpack.c.b16 %v714, %v712
    %v769 = vpack.c.b16 %v717, %v715
    %v770 = vpack.c.b16 %v718, %v716
    %v771 = vpack.c.b16 %v721, %v719
    %v772 = vpack.c.b16 %v722, %v720
    %v773 = vpack.c.b16 %v725, %v723
    %v774 = vpack.c.b16 %v726, %v724
    %v775 = vpack.c.b16 %v729, %v727
    %v776 = vpack.c.b16 %v730, %v728
    %v777 = vpack.c.b16 %v733, %v731
    %v778 = vpack.c.b16 %v734, %v732
    %v779 = vpack.c.b16 %v737, %v735
    %v780 = vpack.c.b16 %v738, %v736
    %v781 = vpack.c.b16 %v741, %v739
    %v782 = vpack.c.b16 %v742, %v740
    %v783 = vpack.c.b16 %v745, %v743
    %v784 = vpack.c.b16 %v746, %v744
    %v785 = vpack.c.b16 %v749, %v747
    %v786 = vpack.c.b16 %v750, %v748
    %v787 = vpack.c.b16 %v753, %v751
    %v788 = vpack.c.b16 %v754, %v752
    %v789 = vpack.c.b16 %v757, %v755
    %v790 = vpack.c.b16 %v758, %v756
    %823 = vmatprep.subr.bf16.mxu0 %v774
    %824 = vmatpush1.bf16.msra.mxu0 %v773
    %825 = vmatprep.subr.bf16.mxu0 %v772
    %826 = vmatpush1.bf16.msra.mxu0 %v771
    %827 = vmatprep.subr.bf16.mxu0 %v770
    %828 = vmatpush1.bf16.msra.mxu0 %v769
    %829 = vmatprep.subr.bf16.mxu0 %v768
    %830 = vmatpush1.bf16.msra.mxu0 %v767
    %831 = vmatprep.subr.bf16.mxu0 %v766
    %832 = vmatpush1.bf16.msra.mxu0 %v765
    %833 = vmatprep.subr.bf16.mxu0 %v764
    %834 = vmatpush1.bf16.msra.mxu0 %v763
    %835 = vmatprep.subr.bf16.mxu0 %v762
    %836 = vmatpush1.bf16.msra.mxu0 %v761
    %837 = vmatprep.subr.bf16.mxu0 %v760
    %838 = vmatpush1.bf16.msra.mxu0 %v759
    %839 = vmatprep.subr.bf16.mxu0 %v790
    %840 = vmatpush2.bf16.msra.mxu0 %v789
    %841 = vmatprep.subr.bf16.mxu0 %v788
    %842 = vmatpush2.bf16.msra.mxu0 %v787
    %843 = vmatprep.subr.bf16.mxu0 %v786
    %844 = vmatpush2.bf16.msra.mxu0 %v785
    %845 = vmatprep.subr.bf16.mxu0 %v784
    %846 = vmatpush2.bf16.msra.mxu0 %v783
    %847 = vmatprep.subr.bf16.mxu0 %v782
    %848 = vmatpush2.bf16.msra.mxu0 %v781
    %849 = vmatprep.subr.bf16.mxu0 %v780
    %850 = vmatpush2.bf16.msra.mxu0 %v779
    %851 = vmatprep.subr.bf16.mxu0 %v778
    %852 = vmatpush2.bf16.msra.mxu0 %v777
    %853 = vmatprep.subr.bf16.mxu0 %v776
    %854 = vmatpush2.bf16.msra.mxu0 %v775
    %855 = vmatprep.mubr.bf16.mxu0 %v651
    %856 = vmatmul.mubr.bf16.gmra.mxu0 %v650
    %v857 = vpop.f32.mrf.mxu0
    %v858 = vadd.f32 %v656, %v857
    %v859 = vpop.f32.mrf.mxu0
    %v860 = vadd.f32 %v660, %v859
    %v861 = vpop.f32.mrf.mxu0
    %v862 = vpop.f32.mrf.mxu0
    %863 = vdwg.mxu0
    %v864 = vmax.f32 %v858, 0.0
    %v865 = vmax.f32 %v860, 0.0
    %v867 = vlaneseq
    %v868 = vshrl.u32 %v867, 7
    %v869 = vsub.s32 0, %v868
    %v870 = vrot.slane %v83, %v869
    %v871 = vlaneseq
    %v872 = vshrl.u32 %v871, 7
    %v873 = vsub.s32 1, %v872
    %v874 = vrot.slane %v83, %v873
    %v877 = vmul.f32 %v864, %v870
    %v878 = vmul.f32 %v865, %v874
    %vm879 = vcmask 1043456
    %v880 = vsel %vm879, %v877, 0.0
    %v881 = vsel %vm879, %v878, 0.0
    %v882 = vadd.f32 %v880, %v881
    %883 = vadd.xlane.f32.xlu0 %v882
    %v884 = vpop.xlane.xlu0 %883
    %v885 = vadd.f32 %v884, %v84
    %vm886 = vcmask 3072
    %887 = vst.msk [vmem:[%s4] sm:$0xf] %vm886, %v885
    // Predicated region
    $region22: #{gnn_critic2_forward.1} parent=1 // pred_check
      _
    $region23: #{gnn_critic2_forward.1} parent=1 // pred_check_branch
      %889 = sbr.rel (0) target = $region25
    $region24: #{gnn_critic2_forward.1} parent=1 // pred_region
      _
    $region25: #{gnn_critic2_forward.1} parent=1 // pred_fallthru
      _
    // Predicated region
    $region26: #{gnn_critic2_forward.1} parent=1 // pred_check
      _
    $region27: #{gnn_critic2_forward.1} parent=1 // pred_check_branch
      %891 = sbr.rel (0) target = $region29
    $region28: #{gnn_critic2_forward.1} parent=1 // pred_region
      _
    $region29: #{gnn_critic2_forward.1} parent=1 // pred_fallthru
      _
    %892 = vsyncpa [#allocation3], 1

</llo_original>
